<compile_context>
chip_gen: v5e
topology: v5e:2x2
jax: 0.10.0
libtpu: 0.0.40
codegen_flags: <defaults>
</compile_context>

<pallas_src>
import functools

import jax
import jax.numpy as jnp
from jax.experimental import pallas as pl
from jax.experimental.pallas import tpu as pltpu


def _round_up(x, m):
    return ((x + m - 1) // m) * m


# ---------------------------------------------------------------------------
# Fused kernel:
#   rel_out  = float32(rel);  rel_out[rel_dontcare] = ignore_index
#   ev_out   = float32(ev);   ev_out[ev_dontcare]   = ignore_index
#   text_attn = (text_ids != pad_id) -> int8
#   sent_attn = (sent_ids != pad_id) -> int8
# ---------------------------------------------------------------------------
def _collate_kernel(rel_ref, ev_ref, rel_m_ref, ev_m_ref,
                    text_ids_ref, sent_ids_ref,
                    rel_out_ref, ev_out_ref, text_attn_ref, sent_attn_ref,
                    *, ignore_index, pad_token_id, apply_masking):
    rel = rel_ref[...].astype(jnp.float32)
    ev = ev_ref[...].astype(jnp.float32)
    if apply_masking:
        rel_m = rel_m_ref[...]
        ev_m = ev_m_ref[...]
        rel_pred = rel_m if rel_m.dtype == jnp.bool_ else (rel_m != 0)
        ev_pred = ev_m if ev_m.dtype == jnp.bool_ else (ev_m != 0)
        rel = jnp.where(rel_pred, ignore_index, rel)
        ev = jnp.where(ev_pred, ignore_index, ev)
    rel_out_ref[...] = rel
    ev_out_ref[...] = ev
    text_attn_ref[...] = (text_ids_ref[...] != pad_token_id).astype(jnp.int8)
    sent_attn_ref[...] = (sent_ids_ref[...] != pad_token_id).astype(jnp.int8)


def _choose_tile_n(n, bytes_per_row):
    """Bytes-based row-tile selection (fits the smallest scoped-VMEM default)."""
    if n <= 32:
        return n
    budget = 12 << 20                       # < v5e's 16 MiB default scoped VMEM
    max_rows = max(32, budget // max(1, 2 * bytes_per_row))   # x2 double-buffer
    tile = min(n, 1024, max_rows)
    # v7x megacore: guarantee >= 2 grid steps for non-trivial batches so the
    # "parallel" axis shards across both TensorCores (no-op on v5e/v6e).
    if n >= 64:
        tile = min(tile, _round_up(pl.cdiv(n, 2), 32))
    if tile < n:
        tile = max(32, (tile // 32) * 32)   # int8 sublane tiling -> 32-row tiles
    return tile


def _fused_collate(relevance_labels, evidence_labels,
                   relevance_dontcare_mask, evidence_dontcare_mask,
                   text_token_ids, sentence_token_ids,
                   pad_token_id, apply_ignore_index):
    n, c = relevance_labels.shape
    s_text = text_token_ids.shape[1]
    s_sent = sentence_token_ids.shape[1]

    bytes_per_row = (
        relevance_labels.dtype.itemsize * c
        + evidence_labels.dtype.itemsize * c
        + relevance_dontcare_mask.dtype.itemsize * c
        + evidence_dontcare_mask.dtype.itemsize * c
        + text_token_ids.dtype.itemsize * s_text
        + sentence_token_ids.dtype.itemsize * s_sent
        + 4 * c * 2            # f32 label outputs
        + s_text + s_sent      # int8 attention-mask outputs
    )
    tile_n = _choose_tile_n(n, bytes_per_row)
    grid = (pl.cdiv(n, tile_n),)

    # Explicit VMEM contract derived from the chosen tile (x2 double-buffer per
    # operand + headroom); never below the 16 MiB default, never above 60 MiB.
    needed = 2 * tile_n * bytes_per_row
    vmem_limit = int(min(max(needed * 3 // 2 + (2 << 20), 16 << 20), 60 << 20))

    kernel = functools.partial(
        _collate_kernel,
        ignore_index=(float(apply_ignore_index)
                      if apply_ignore_index is not None else 0.0),
        pad_token_id=int(pad_token_id),
        apply_masking=apply_ignore_index is not None,
    )

    def row_spec(cols):
        return pl.BlockSpec((tile_n, cols), lambda i: (i, 0))

    # TODO(synk): if profiling shows exposed inbound DMA, bump the two token-id
    # specs to pipeline_mode=pl.Buffered(3) (VMEM headroom permitting).
    return pl.pallas_call(
        kernel,
        grid=grid,
        in_specs=[row_spec(c), row_spec(c), row_spec(c), row_spec(c),
                  row_spec(s_text), row_spec(s_sent)],
        out_specs=(row_spec(c), row_spec(c), row_spec(s_text), row_spec(s_sent)),
        out_shape=(
            jax.ShapeDtypeStruct((n, c), jnp.float32),
            jax.ShapeDtypeStruct((n, c), jnp.float32),
            jax.ShapeDtypeStruct((n, s_text), jnp.int8),
            jax.ShapeDtypeStruct((n, s_sent), jnp.int8),
        ),
        compiler_params=pltpu.CompilerParams(
            dimension_semantics=("parallel",),
            vmem_limit_bytes=vmem_limit),
    )(relevance_labels, evidence_labels,
      relevance_dontcare_mask, evidence_dontcare_mask,
      text_token_ids, sentence_token_ids)


def _jnp_collate(relevance_labels, evidence_labels,
                 relevance_dontcare_mask, evidence_dontcare_mask,
                 text_token_ids, sentence_token_ids,
                 pad_token_id, apply_ignore_index):
    """Small-batch fast path: XLA fuses these elementwise ops natively."""
    rel = relevance_labels.astype(jnp.float32)
    ev = evidence_labels.astype(jnp.float32)
    if apply_ignore_index is not None:
        rel = jnp.where(relevance_dontcare_mask.astype(bool),
                        float(apply_ignore_index), rel)
        ev = jnp.where(evidence_dontcare_mask.astype(bool),
                       float(apply_ignore_index), ev)
    text_attn = (text_token_ids != pad_token_id).astype(jnp.int8)
    sent_attn = (sentence_token_ids != pad_token_id).astype(jnp.int8)
    return rel, ev, text_attn, sent_attn


# ---------------------------------------------------------------------------
# Wrapper mimicking StatementSentenceCollater.forward()'s numeric outputs.
# TODO(synk): tokenization / string batching (prompt prepending, huggingface
# tokenizer calls, batch-id string construction, sample dropping) has no Pallas
# equivalent; this wrapper assumes pre-tokenized padded token-id tensors
# (ideally padded to a multiple of 128 tokens for lane-dense stores).
# ---------------------------------------------------------------------------
def statement_sentence_collate(sentence_token_ids, text_token_ids,
                               relevance_labels, evidence_labels,
                               relevance_dontcare_mask, evidence_dontcare_mask,
                               statement_ids,
                               pad_token_id=0, apply_ignore_index=-100,
                               force_pallas=False):
    n = relevance_labels.shape[0]
    s_text = text_token_ids.shape[1]

    operands = (relevance_labels, evidence_labels,
                relevance_dontcare_mask, evidence_dontcare_mask,
                text_token_ids, sentence_token_ids)
    total_bytes = sum(int(x.size) * x.dtype.itemsize for x in operands)

    if force_pallas or total_bytes >= (2 << 20):
        rel, ev, text_attn, sent_attn = _fused_collate(
            relevance_labels, evidence_labels,
            relevance_dontcare_mask, evidence_dontcare_mask,
            text_token_ids, sentence_token_ids,
            pad_token_id, apply_ignore_index)
    else:
        rel, ev, text_attn, sent_attn = _jnp_collate(
            relevance_labels, evidence_labels,
            relevance_dontcare_mask, evidence_dontcare_mask,
            text_token_ids, sentence_token_ids,
            pad_token_id, apply_ignore_index)

    # Pure constants in the original module -> let XLA constant-fold them.
    cls_token_indices = jnp.zeros((n,), dtype=jnp.int32)      # CLS kept at index 0
    target_token_mask = jnp.zeros((n, s_text), dtype=jnp.bool_)

    return {
        "sentence_token_ids": sentence_token_ids,
        "sentence_attention_mask": sent_attn,
        "text_token_ids": text_token_ids,
        "text_attention_mask": text_attn,
        "text_cls_token_indices": cls_token_indices,
        "text_target_token_mask": target_token_mask,
        "relevance": rel,
        "evidence": ev,
        "relevance_dontcare_mask": relevance_dontcare_mask,
        "evidence_dontcare_mask": evidence_dontcare_mask,
        "statement_id": statement_ids,
        "dropped_sample_count": 0,
        "batch_size": n,
    }


def _make_inputs(key, n, c, s_text, s_sent, pad_id):
    k1, k2, k3, k4, k5, k6, k7 = jax.random.split(key, 7)
    text_ids = jax.random.randint(k1, (n, s_text), 1, 1000, dtype=jnp.int32)
    text_lens = jax.random.randint(k2, (n,), s_text // 4, s_text + 1, dtype=jnp.int32)
    text_ids = jnp.where(jnp.arange(s_text)[None, :] < text_lens[:, None],
                         text_ids, pad_id)
    sent_ids = jax.random.randint(k3, (n, s_sent), 1, 1000, dtype=jnp.int32)
    sent_lens = jax.random.randint(k4, (n,), 8, s_sent // 2, dtype=jnp.int32)
    sent_ids = jnp.where(jnp.arange(s_sent)[None, :] < sent_lens[:, None],
                         sent_ids, pad_id)
    rel_labels = jax.random.randint(k5, (n, c), 0, 2, dtype=jnp.int32)
    ev_labels = jax.random.randint(k6, (n, c), 0, 2, dtype=jnp.int32)
    masks = jax.random.bernoulli(k7, 0.25, (2, n, c))          # native bool
    return text_ids, sent_ids, rel_labels, ev_labels, masks[0], masks[1]


def _check(out, text_ids, sent_ids, rel_labels, ev_labels, rel_mask, ev_mask,
           pad_id, ignore_index):
    ref_rel = jnp.where(rel_mask, float(ignore_index), rel_labels.astype(jnp.float32))
    ref_ev = jnp.where(ev_mask, float(ignore_index), ev_labels.astype(jnp.float32))
    assert out["relevance"].dtype == jnp.float32
    assert out["evidence"].dtype == jnp.float32
    assert jnp.array_equal(out["relevance"], ref_rel)
    assert jnp.array_equal(out["evidence"], ref_ev)
    assert out["text_attention_mask"].dtype == jnp.int8
    assert out["sentence_attention_mask"].dtype == jnp.int8
    assert jnp.array_equal(out["text_attention_mask"],
                           (text_ids != pad_id).astype(jnp.int8))
    assert jnp.array_equal(out["sentence_attention_mask"],
                           (sent_ids != pad_id).astype(jnp.int8))
    assert out["text_target_token_mask"].dtype == jnp.bool_
    assert not bool(out["text_target_token_mask"].any())
    assert not bool(out["text_cls_token_indices"].any())


if __name__ == "__main__":
    PAD_ID = 0
    IGNORE_INDEX = -100
    key = jax.random.PRNGKey(0)
    k_big, k_small = jax.random.split(key)

    # --- Pallas path (forced; 128-multiple sequence lengths, >=2 grid steps) ---
    N, C, S_TEXT, S_SENT = 64, 11, 256, 128
    text_ids, sent_ids, rel_labels, ev_labels, rel_mask, ev_mask = _make_inputs(
        k_big, N, C, S_TEXT, S_SENT, PAD_ID)
    statement_ids = jnp.arange(N, dtype=jnp.int32)
    out = statement_sentence_collate(sent_ids, text_ids,
                                     rel_labels, ev_labels,
                                     rel_mask, ev_mask,
                                     statement_ids,
                                     pad_token_id=PAD_ID,
                                     apply_ignore_index=IGNORE_INDEX,
                                     force_pallas=True)
    jax.block_until_ready(out)
    _check(out, text_ids, sent_ids, rel_labels, ev_labels, rel_mask, ev_mask,
           PAD_ID, IGNORE_INDEX)

    # --- Small-batch fast path (typical collater batch, no pallas_call) ---
    n2, s2 = 8, 128
    text2, sent2, rel2, ev2, rmask2, emask2 = _make_inputs(
        k_small, n2, C, s2, s2, PAD_ID)
    out2 = statement_sentence_collate(sent2, text2, rel2, ev2, rmask2, emask2,
                                      jnp.arange(n2, dtype=jnp.int32),
                                      pad_token_id=PAD_ID,
                                      apply_ignore_index=IGNORE_INDEX)
    jax.block_until_ready(out2)
    _check(out2, text2, sent2, rel2, ev2, rmask2, emask2, PAD_ID, IGNORE_INDEX)

    print("KERNEL_OK")
</pallas_src>

<mosaic_0001>
module attributes {stable_mosaic.version = 11 : i64} {
  func.func @_collate_kernel(%arg0: i32, %arg1: memref<32x11xi32, #tpu.memory_space<vmem>>, %arg2: memref<32x11xi32, #tpu.memory_space<vmem>>, %arg3: memref<32x11xi32, #tpu.memory_space<vmem>>, %arg4: memref<32x11xi32, #tpu.memory_space<vmem>>, %arg5: memref<32x256xi32, #tpu.memory_space<vmem>>, %arg6: memref<32x128xi32, #tpu.memory_space<vmem>>, %arg7: memref<32x11xf32, #tpu.memory_space<vmem>>, %arg8: memref<32x11xf32, #tpu.memory_space<vmem>>, %arg9: memref<32x256xi8, #tpu.memory_space<vmem>>, %arg10: memref<32x128xi8, #tpu.memory_space<vmem>>) attributes {dimension_semantics = [#tpu.dimension_semantics<parallel>], iteration_bounds = array<i64: 2>, scalar_prefetch = 0 : i64, scratch_operands = 0 : i64, tpu.core_type = #tpu.core_type<tc>, window_params = [{transform_indices = @transform_0, window_bounds = array<i64: 32, 11>}, {transform_indices = @transform_1, window_bounds = array<i64: 32, 11>}, {transform_indices = @transform_2, window_bounds = array<i64: 32, 11>}, {transform_indices = @transform_3, window_bounds = array<i64: 32, 11>}, {transform_indices = @transform_4, window_bounds = array<i64: 32, 256>}, {transform_indices = @transform_5, window_bounds = array<i64: 32, 128>}, {transform_indices = @transform_6, window_bounds = array<i64: 32, 11>}, {transform_indices = @transform_7, window_bounds = array<i64: 32, 11>}, {transform_indices = @transform_8, window_bounds = array<i64: 32, 256>}, {transform_indices = @transform_9, window_bounds = array<i64: 32, 128>}]} {
    %c0 = arith.constant 0 : index
    %c0_0 = arith.constant 0 : index
    %0 = vector.load %arg1[%c0, %c0_0] : memref<32x11xi32, #tpu.memory_space<vmem>>, vector<32x11xi32>
    %1 = arith.sitofp %0 : vector<32x11xi32> to vector<32x11xf32>
    %c0_1 = arith.constant 0 : index
    %c0_2 = arith.constant 0 : index
    %2 = vector.load %arg2[%c0_1, %c0_2] : memref<32x11xi32, #tpu.memory_space<vmem>>, vector<32x11xi32>
    %3 = arith.sitofp %2 : vector<32x11xi32> to vector<32x11xf32>
    %c0_3 = arith.constant 0 : index
    %c0_4 = arith.constant 0 : index
    %4 = vector.load %arg3[%c0_3, %c0_4] : memref<32x11xi32, #tpu.memory_space<vmem>>, vector<32x11xi32>
    %cst = arith.constant dense<0> : vector<32x11xi32>
    %5 = arith.cmpi ne, %4, %cst : vector<32x11xi32>
    %c0_5 = arith.constant 0 : index
    %c0_6 = arith.constant 0 : index
    %6 = vector.load %arg4[%c0_5, %c0_6] : memref<32x11xi32, #tpu.memory_space<vmem>>, vector<32x11xi32>
    %cst_7 = arith.constant dense<0> : vector<32x11xi32>
    %7 = arith.cmpi ne, %6, %cst_7 : vector<32x11xi32>
    %cst_8 = arith.constant -1.000000e+02 : f32
    %8 = vector.broadcast %cst_8 : f32 to vector<32x11xf32>
    %9 = arith.select %5, %8, %1 : vector<32x11xi1>, vector<32x11xf32>
    %cst_9 = arith.constant -1.000000e+02 : f32
    %10 = vector.broadcast %cst_9 : f32 to vector<32x11xf32>
    %11 = arith.select %7, %10, %3 : vector<32x11xi1>, vector<32x11xf32>
    %c0_10 = arith.constant 0 : index
    %c0_11 = arith.constant 0 : index
    %12 = vector.load %arg7[%c0_10, %c0_11] : memref<32x11xf32, #tpu.memory_space<vmem>>, vector<32x11xf32>
    tpu.vector_store %arg7[%c0_10, %c0_11], %9 {strides = array<i32>} : memref<32x11xf32, #tpu.memory_space<vmem>>, vector<32x11xf32>,
    %c0_12 = arith.constant 0 : index
    %c0_13 = arith.constant 0 : index
    %13 = vector.load %arg8[%c0_12, %c0_13] : memref<32x11xf32, #tpu.memory_space<vmem>>, vector<32x11xf32>
    tpu.vector_store %arg8[%c0_12, %c0_13], %11 {strides = array<i32>} : memref<32x11xf32, #tpu.memory_space<vmem>>, vector<32x11xf32>,
    %c0_14 = arith.constant 0 : index
    %c0_15 = arith.constant 0 : index
    %14 = vector.load %arg5[%c0_14, %c0_15] : memref<32x256xi32, #tpu.memory_space<vmem>>, vector<32x256xi32>
    %c0_i32 = arith.constant 0 : i32
    %15 = vector.broadcast %c0_i32 : i32 to vector<32x256xi32>
    %16 = arith.cmpi ne, %14, %15 : vector<32x256xi32>
    %17 = arith.extui %16 : vector<32x256xi1> to vector<32x256xi8>
    %c0_16 = arith.constant 0 : index
    %c0_17 = arith.constant 0 : index
    %18 = vector.load %arg9[%c0_16, %c0_17] : memref<32x256xi8, #tpu.memory_space<vmem>>, vector<32x256xi8>
    tpu.vector_store %arg9[%c0_16, %c0_17], %17 {strides = array<i32>} : memref<32x256xi8, #tpu.memory_space<vmem>>, vector<32x256xi8>,
    %c0_18 = arith.constant 0 : index
    %c0_19 = arith.constant 0 : index
    %19 = vector.load %arg6[%c0_18, %c0_19] : memref<32x128xi32, #tpu.memory_space<vmem>>, vector<32x128xi32>
    %c0_i32_20 = arith.constant 0 : i32
    %20 = vector.broadcast %c0_i32_20 : i32 to vector<32x128xi32>
    %21 = arith.cmpi ne, %19, %20 : vector<32x128xi32>
    %22 = arith.extui %21 : vector<32x128xi1> to vector<32x128xi8>
    %c0_21 = arith.constant 0 : index
    %c0_22 = arith.constant 0 : index
    %23 = vector.load %arg10[%c0_21, %c0_22] : memref<32x128xi8, #tpu.memory_space<vmem>>, vector<32x128xi8>
    tpu.vector_store %arg10[%c0_21, %c0_22], %22 {strides = array<i32>} : memref<32x128xi8, #tpu.memory_space<vmem>>, vector<32x128xi8>,
    return
  }
  func.func @transform_0(%arg0: i32) -> (i32, i32) {
    %c0_i32 = arith.constant 0 : i32
    %c0_i32_0 = arith.constant 0 : i32
    return %arg0, %c0_i32 : i32, i32
  }
  func.func @transform_1(%arg0: i32) -> (i32, i32) {
    %c0_i32 = arith.constant 0 : i32
    %c0_i32_0 = arith.constant 0 : i32
    return %arg0, %c0_i32 : i32, i32
  }
  func.func @transform_2(%arg0: i32) -> (i32, i32) {
    %c0_i32 = arith.constant 0 : i32
    %c0_i32_0 = arith.constant 0 : i32
    return %arg0, %c0_i32 : i32, i32
  }
  func.func @transform_3(%arg0: i32) -> (i32, i32) {
    %c0_i32 = arith.constant 0 : i32
    %c0_i32_0 = arith.constant 0 : i32
    return %arg0, %c0_i32 : i32, i32
  }
  func.func @transform_4(%arg0: i32) -> (i32, i32) {
    %c0_i32 = arith.constant 0 : i32
    %c0_i32_0 = arith.constant 0 : i32
    return %arg0, %c0_i32 : i32, i32
  }
  func.func @transform_5(%arg0: i32) -> (i32, i32) {
    %c0_i32 = arith.constant 0 : i32
    %c0_i32_0 = arith.constant 0 : i32
    return %arg0, %c0_i32 : i32, i32
  }
  func.func @transform_6(%arg0: i32) -> (i32, i32) {
    %c0_i32 = arith.constant 0 : i32
    %c0_i32_0 = arith.constant 0 : i32
    return %arg0, %c0_i32 : i32, i32
  }
  func.func @transform_7(%arg0: i32) -> (i32, i32) {
    %c0_i32 = arith.constant 0 : i32
    %c0_i32_0 = arith.constant 0 : i32
    return %arg0, %c0_i32 : i32, i32
  }
  func.func @transform_8(%arg0: i32) -> (i32, i32) {
    %c0_i32 = arith.constant 0 : i32
    %c0_i32_0 = arith.constant 0 : i32
    return %arg0, %c0_i32 : i32, i32
  }
  func.func @transform_9(%arg0: i32) -> (i32, i32) {
    %c0_i32 = arith.constant 0 : i32
    %c0_i32_0 = arith.constant 0 : i32
    return %arg0, %c0_i32 : i32, i32
  }
}

</mosaic_0001>

<llo_original>
// kernel: tpu_custom_call.1
$region0: #{tpu_custom_call.1}
  #allocation0 [shape = 'u32[]', space=smem, size = 0x4, offset = 0x4, fixed_abs, tag = 'smem constant byte address 0x4 - core index']
  #allocation1 [shape = 'u32[72,128]{1,0:T(1,128)}', space=vmem, size = 0x9000, scoped, tag = 'internal scratch']
  %s0 = inlined_call_operand.vmem [shape: s32[64,11], index: 0, kind: input, shape index: {}]
  %s1 = inlined_call_operand.vmem [shape: s32[64,11], index: 1, kind: input, shape index: {}]
  %s2 = inlined_call_operand.vmem [shape: s32[64,11], index: 2, kind: input, shape index: {}]
  %s3 = inlined_call_operand.vmem [shape: s32[64,11], index: 3, kind: input, shape index: {}]
  %s4 = inlined_call_operand.vmem [shape: s32[64,256], index: 4, kind: input, shape index: {}]
  %s5 = inlined_call_operand.vmem [shape: s32[64,128], index: 5, kind: input, shape index: {}]
  %s6 = inlined_call_operand.vmem [shape: f32[64,11], index: 6, kind: output, shape index: {0}]
  %s7 = inlined_call_operand.vmem [shape: f32[64,11], index: 7, kind: output, shape index: {1}]
  %s8 = inlined_call_operand.hbm [shape: s8[64,256], index: 8, kind: output, shape index: {2}]
  %s9 = inlined_call_operand.hbm [shape: s8[64,128], index: 9, kind: output, shape index: {3}]
  %10 = xla_tuple %s6, %s7, %s8, %s9
  %s11 = sld [smem:[#allocation0]]
  $region81: #{tpu_custom_call.1} parent=0
    _
  %s13 = ssub.s32 1, %s11
  %s14 = scalar_select 0, %s13, %s11
  $region1: #{tpu_custom_call.1} parent=0
    #allocation2 [shape = 'u8[16384]{0}', space=vmem, size = 0x4000, scoped, tag = 'output window, operand 2']
    #allocation3 [shape = 's32[2]{0}', space=sflag, size = 0x8, scoped, tag = 'scoped memory for tpu_custom_call.1']
    #allocation4 [shape = 'u8[8192]{0}', space=vmem, size = 0x2000, scoped, tag = 'output window, operand 3']
    #allocation5 [shape = 's32[2]{0}', space=sflag, size = 0x8, scoped, tag = 'scoped memory for tpu_custom_call.1']
    %15 = vsyncpa [#allocation3], 0
    %s16 = scalar_lea.sflag [#allocation3], 1
    %17 = vsyncpa %s16, 0
    %18 = vsyncpa [#allocation5], 0
    %s19 = scalar_lea.sflag [#allocation5], 1
    %20 = vsyncpa %s19, 0
    loop: start=0, step=1, limit=4
    $region2: #{tpu_custom_call.1} parent=1 // loop_pre_header
      _
    $region3: #{tpu_custom_call.1} parent=1 // loop_header
      %s22 = sphi 0, %s26
      %p23 = scmp.ge.s32.totalorder %s22, 4
      %s32 = sphi 0, %s34
      %s35 = sphi 0, %s32
      %s36 = sphi 0, %s35
      %s52 = sphi 0, %s36
      %s58 = sphi 0, %s60
      %s61 = sphi 0, %s58
      %s62 = sphi 0, %s61
      %s78 = sphi 0, %s62
      %s84 = sphi 0, %s86
      %s87 = sphi 0, %s84
      %s88 = sphi 0, %s87
      %s104 = sphi 0, %s88
      %s110 = sphi 0, %s112
      %s113 = sphi 0, %s110
      %s114 = sphi 0, %s113
      %s130 = sphi 0, %s114
      %s136 = sphi 0, %s138
      %s139 = sphi 0, %s136
      %s140 = sphi 0, %s139
      %s156 = sphi 0, %s140
      %s162 = sphi 0, %s164
      %s165 = sphi 0, %s162
      %s166 = sphi 0, %s165
      %s182 = sphi 0, %s166
      %s188 = sphi 0, %s190
      %s191 = sphi 0, %s188
      %s192 = sphi 0, %s191
      %s208 = sphi 0, %s192
      %s214 = sphi 0, %s216
      %s217 = sphi 0, %s214
      %s218 = sphi 0, %s217
      %s234 = sphi 0, %s218
      %s240 = sphi 0, %s242
      %s243 = sphi 0, %s240
      %s244 = sphi 0, %s243
      %s260 = sphi 0, %s244
      %s266 = sphi 0, %s268
      %s269 = sphi 0, %s266
      %s270 = sphi 0, %s269
      %s286 = sphi 0, %s270
    $region4: #{tpu_custom_call.1} parent=1 // loop_header_branch
      %25 = sbr.rel (%p23) target = $region8
    $region5: #{tpu_custom_call.1} parent=1 // loop_body
      %s27 = ssub.s32 %s22, 1
      %s28 = ssub.s32 %s22, 2
      %s29 = sadd.s32 %s22, 1
      %s30 = ssub.s32 %s22, %s29
      %p31 = scmp.eq.s32.totalorder %s30, 0
      %s33 = sadd.s32 %s32, 1
      %s34 = scalar_select %p31, %s32, %s33
      %p37 = pneg %p31
      %p38 = scmp.eq.s32.totalorder %s22, 1
      %p39 = por %p37, %p38
      %p40 = scmp.ne.s32.totalorder %s32, %s35
      %p41 = scmp.eq.s32.totalorder %s22, 0
      %p42 = por %p40, %p41
      %p43 = scmp.ne.s32.totalorder %s32, %s35
      %p44 = scmp.eq.s32.totalorder %s27, 1
      %p45 = por %p43, %p44
      %p46 = scmp.ne.s32.totalorder %s35, %s36
      %p47 = scmp.eq.s32.totalorder %s27, 0
      %p48 = por %p46, %p47
      %p49 = scmp.ne.s32.totalorder %s35, %s36
      %p50 = scmp.eq.s32.totalorder %s28, 1
      %p51 = por %p49, %p50
      %p53 = scmp.ne.s32.totalorder %s36, %s52
      %p54 = scmp.eq.s32.totalorder %s28, 0
      %p55 = por %p53, %p54
      %s56 = ssub.s32 %s22, %s29
      %p57 = scmp.eq.s32.totalorder %s56, 0
      %s59 = sadd.s32 %s58, 1
      %s60 = scalar_select %p57, %s58, %s59
      %p63 = pneg %p57
      %p64 = scmp.eq.s32.totalorder %s22, 1
      %p65 = por %p63, %p64
      %p66 = scmp.ne.s32.totalorder %s58, %s61
      %p67 = scmp.eq.s32.totalorder %s22, 0
      %p68 = por %p66, %p67
      %p69 = scmp.ne.s32.totalorder %s58, %s61
      %p70 = scmp.eq.s32.totalorder %s27, 1
      %p71 = por %p69, %p70
      %p72 = scmp.ne.s32.totalorder %s61, %s62
      %p73 = scmp.eq.s32.totalorder %s27, 0
      %p74 = por %p72, %p73
      %p75 = scmp.ne.s32.totalorder %s61, %s62
      %p76 = scmp.eq.s32.totalorder %s28, 1
      %p77 = por %p75, %p76
      %p79 = scmp.ne.s32.totalorder %s62, %s78
      %p80 = scmp.eq.s32.totalorder %s28, 0
      %p81 = por %p79, %p80
      %s82 = ssub.s32 %s22, %s29
      %p83 = scmp.eq.s32.totalorder %s82, 0
      %s85 = sadd.s32 %s84, 1
      %s86 = scalar_select %p83, %s84, %s85
      %p89 = pneg %p83
      %p90 = scmp.eq.s32.totalorder %s22, 1
      %p91 = por %p89, %p90
      %p92 = scmp.ne.s32.totalorder %s84, %s87
      %p93 = scmp.eq.s32.totalorder %s22, 0
      %p94 = por %p92, %p93
      %p95 = scmp.ne.s32.totalorder %s84, %s87
      %p96 = scmp.eq.s32.totalorder %s27, 1
      %p97 = por %p95, %p96
      %p98 = scmp.ne.s32.totalorder %s87, %s88
      %p99 = scmp.eq.s32.totalorder %s27, 0
      %p100 = por %p98, %p99
      %p101 = scmp.ne.s32.totalorder %s87, %s88
      %p102 = scmp.eq.s32.totalorder %s28, 1
      %p103 = por %p101, %p102
      %p105 = scmp.ne.s32.totalorder %s88, %s104
      %p106 = scmp.eq.s32.totalorder %s28, 0
      %p107 = por %p105, %p106
      %s108 = ssub.s32 %s22, %s29
      %p109 = scmp.eq.s32.totalorder %s108, 0
      %s111 = sadd.s32 %s110, 1
      %s112 = scalar_select %p109, %s110, %s111
      %p115 = pneg %p109
      %p116 = scmp.eq.s32.totalorder %s22, 1
      %p117 = por %p115, %p116
      %p118 = scmp.ne.s32.totalorder %s110, %s113
      %p119 = scmp.eq.s32.totalorder %s22, 0
      %p120 = por %p118, %p119
      %p121 = scmp.ne.s32.totalorder %s110, %s113
      %p122 = scmp.eq.s32.totalorder %s27, 1
      %p123 = por %p121, %p122
      %p124 = scmp.ne.s32.totalorder %s113, %s114
      %p125 = scmp.eq.s32.totalorder %s27, 0
      %p126 = por %p124, %p125
      %p127 = scmp.ne.s32.totalorder %s113, %s114
      %p128 = scmp.eq.s32.totalorder %s28, 1
      %p129 = por %p127, %p128
      %p131 = scmp.ne.s32.totalorder %s114, %s130
      %p132 = scmp.eq.s32.totalorder %s28, 0
      %p133 = por %p131, %p132
      %s134 = ssub.s32 %s22, %s29
      %p135 = scmp.eq.s32.totalorder %s134, 0
      %s137 = sadd.s32 %s136, 1
      %s138 = scalar_select %p135, %s136, %s137
      %p141 = pneg %p135
      %p142 = scmp.eq.s32.totalorder %s22, 1
      %p143 = por %p141, %p142
      %p144 = scmp.ne.s32.totalorder %s136, %s139
      %p145 = scmp.eq.s32.totalorder %s22, 0
      %p146 = por %p144, %p145
      %p147 = scmp.ne.s32.totalorder %s136, %s139
      %p148 = scmp.eq.s32.totalorder %s27, 1
      %p149 = por %p147, %p148
      %p150 = scmp.ne.s32.totalorder %s139, %s140
      %p151 = scmp.eq.s32.totalorder %s27, 0
      %p152 = por %p150, %p151
      %p153 = scmp.ne.s32.totalorder %s139, %s140
      %p154 = scmp.eq.s32.totalorder %s28, 1
      %p155 = por %p153, %p154
      %p157 = scmp.ne.s32.totalorder %s140, %s156
      %p158 = scmp.eq.s32.totalorder %s28, 0
      %p159 = por %p157, %p158
      %s160 = ssub.s32 %s22, %s29
      %p161 = scmp.eq.s32.totalorder %s160, 0
      %s163 = sadd.s32 %s162, 1
      %s164 = scalar_select %p161, %s162, %s163
      %p167 = pneg %p161
      %p168 = scmp.eq.s32.totalorder %s22, 1
      %p169 = por %p167, %p168
      %p170 = scmp.ne.s32.totalorder %s162, %s165
      %p171 = scmp.eq.s32.totalorder %s22, 0
      %p172 = por %p170, %p171
      %p173 = scmp.ne.s32.totalorder %s162, %s165
      %p174 = scmp.eq.s32.totalorder %s27, 1
      %p175 = por %p173, %p174
      %p176 = scmp.ne.s32.totalorder %s165, %s166
      %p177 = scmp.eq.s32.totalorder %s27, 0
      %p178 = por %p176, %p177
      %p179 = scmp.ne.s32.totalorder %s165, %s166
      %p180 = scmp.eq.s32.totalorder %s28, 1
      %p181 = por %p179, %p180
      %p183 = scmp.ne.s32.totalorder %s166, %s182
      %p184 = scmp.eq.s32.totalorder %s28, 0
      %p185 = por %p183, %p184
      %s186 = ssub.s32 %s22, %s29
      %p187 = scmp.eq.s32.totalorder %s186, 0
      %s189 = sadd.s32 %s188, 1
      %s190 = scalar_select %p187, %s188, %s189
      %p193 = pneg %p187
      %p194 = scmp.eq.s32.totalorder %s22, 1
      %p195 = por %p193, %p194
      %p196 = scmp.ne.s32.totalorder %s188, %s191
      %p197 = scmp.eq.s32.totalorder %s22, 0
      %p198 = por %p196, %p197
      %p199 = scmp.ne.s32.totalorder %s188, %s191
      %p200 = scmp.eq.s32.totalorder %s27, 1
      %p201 = por %p199, %p200
      %p202 = scmp.ne.s32.totalorder %s191, %s192
      %p203 = scmp.eq.s32.totalorder %s27, 0
      %p204 = por %p202, %p203
      %p205 = scmp.ne.s32.totalorder %s191, %s192
      %p206 = scmp.eq.s32.totalorder %s28, 1
      %p207 = por %p205, %p206
      %p209 = scmp.ne.s32.totalorder %s192, %s208
      %p210 = scmp.eq.s32.totalorder %s28, 0
      %p211 = por %p209, %p210
      %s212 = ssub.s32 %s22, %s29
      %p213 = scmp.eq.s32.totalorder %s212, 0
      %s215 = sadd.s32 %s214, 1
      %s216 = scalar_select %p213, %s214, %s215
      %p219 = pneg %p213
      %p220 = scmp.eq.s32.totalorder %s22, 1
      %p221 = por %p219, %p220
      %p222 = scmp.ne.s32.totalorder %s214, %s217
      %p223 = scmp.eq.s32.totalorder %s22, 0
      %p224 = por %p222, %p223
      %p225 = scmp.ne.s32.totalorder %s214, %s217
      %p226 = scmp.eq.s32.totalorder %s27, 1
      %p227 = por %p225, %p226
      %p228 = scmp.ne.s32.totalorder %s217, %s218
      %p229 = scmp.eq.s32.totalorder %s27, 0
      %p230 = por %p228, %p229
      %p231 = scmp.ne.s32.totalorder %s217, %s218
      %p232 = scmp.eq.s32.totalorder %s28, 1
      %p233 = por %p231, %p232
      %p235 = scmp.ne.s32.totalorder %s218, %s234
      %p236 = scmp.eq.s32.totalorder %s28, 0
      %p237 = por %p235, %p236
      %s238 = ssub.s32 %s22, %s29
      %p239 = scmp.eq.s32.totalorder %s238, 0
      %s241 = sadd.s32 %s240, 1
      %s242 = scalar_select %p239, %s240, %s241
      %p245 = pneg %p239
      %p246 = scmp.eq.s32.totalorder %s22, 1
      %p247 = por %p245, %p246
      %p248 = scmp.ne.s32.totalorder %s240, %s243
      %p249 = scmp.eq.s32.totalorder %s22, 0
      %p250 = por %p248, %p249
      %p251 = scmp.ne.s32.totalorder %s240, %s243
      %p252 = scmp.eq.s32.totalorder %s27, 1
      %p253 = por %p251, %p252
      %p254 = scmp.ne.s32.totalorder %s243, %s244
      %p255 = scmp.eq.s32.totalorder %s27, 0
      %p256 = por %p254, %p255
      %p257 = scmp.ne.s32.totalorder %s243, %s244
      %p258 = scmp.eq.s32.totalorder %s28, 1
      %p259 = por %p257, %p258
      %p261 = scmp.ne.s32.totalorder %s244, %s260
      %p262 = scmp.eq.s32.totalorder %s28, 0
      %p263 = por %p261, %p262
      %s264 = ssub.s32 %s22, %s29
      %p265 = scmp.eq.s32.totalorder %s264, 0
      %s267 = sadd.s32 %s266, 1
      %s268 = scalar_select %p265, %s266, %s267
      %p271 = pneg %p265
      %p272 = scmp.eq.s32.totalorder %s22, 1
      %p273 = por %p271, %p272
      %p274 = scmp.ne.s32.totalorder %s266, %s269
      %p275 = scmp.eq.s32.totalorder %s22, 0
      %p276 = por %p274, %p275
      %p277 = scmp.ne.s32.totalorder %s266, %s269
      %p278 = scmp.eq.s32.totalorder %s27, 1
      %p279 = por %p277, %p278
      %p280 = scmp.ne.s32.totalorder %s269, %s270
      %p281 = scmp.eq.s32.totalorder %s27, 0
      %p282 = por %p280, %p281
      %p283 = scmp.ne.s32.totalorder %s269, %s270
      %p284 = scmp.eq.s32.totalorder %s28, 1
      %p285 = por %p283, %p284
      %p287 = scmp.ne.s32.totalorder %s270, %s286
      %p288 = scmp.eq.s32.totalorder %s28, 0
      %p289 = por %p287, %p288
      %p290 = scmp.le.s32.totalorder 1, %s22
      %p291 = scmp.lt.s32.totalorder %s22, 3
      %p292 = pnand %p290, %p291
      %p293 = pneg %p292
      // Predicated region
      $region9: #{tpu_custom_call.1} parent=5 // pred_check
        _
      $region10: #{tpu_custom_call.1} parent=5 // pred_check_branch
        %295 = sbr.rel (%p292) target = $region12
      $region11: #{tpu_custom_call.1} parent=5 // pred_region
        %s296 = ssub.s32 %s22, 1
      $region12: #{tpu_custom_call.1} parent=5 // pred_fallthru
        _
      %p297 = scmp.lt.s32.totalorder %s22, 2
      // Predicated region
      $region13: #{tpu_custom_call.1} parent=5 // pred_check
        %p298 = pneg %p297
      $region14: #{tpu_custom_call.1} parent=5 // pred_check_branch
        %300 = sbr.rel (%p298) target = $region16
      $region15: #{tpu_custom_call.1} parent=5 // pred_region
        // Predicated region
        $region17: #{tpu_custom_call.1} parent=15 // pred_check
          %p301 = pneg %p42
        $region18: #{tpu_custom_call.1} parent=15 // pred_check_branch
          %303 = sbr.rel (%p301) target = $region20
        $region19: #{tpu_custom_call.1} parent=15 // pred_region
          %s304 = smul.u32 4, %s22
          %p305 = scmp.lt.s32.totalorder %s304, 7
          %s306 = scalar_select %p305, %s304, 7
          %s307 = smul.addr %s306, 8
          %s308 = scalar_lea.vmem %s0, %s307
          %s309 = smul.u32 4, %s22
        $region20: #{tpu_custom_call.1} parent=15 // pred_fallthru
          _
        // Predicated region
        $region21: #{tpu_custom_call.1} parent=15 // pred_check
          %p310 = pneg %p68
        $region22: #{tpu_custom_call.1} parent=15 // pred_check_branch
          %312 = sbr.rel (%p310) target = $region24
        $region23: #{tpu_custom_call.1} parent=15 // pred_region
          %s313 = smul.u32 4, %s22
          %p314 = scmp.lt.s32.totalorder %s313, 7
          %s315 = scalar_select %p314, %s313, 7
          %s316 = smul.addr %s315, 8
          %s317 = scalar_lea.vmem %s1, %s316
          %s318 = smul.u32 4, %s22
        $region24: #{tpu_custom_call.1} parent=15 // pred_fallthru
          _
        // Predicated region
        $region25: #{tpu_custom_call.1} parent=15 // pred_check
          %p319 = pneg %p94
        $region26: #{tpu_custom_call.1} parent=15 // pred_check_branch
          %321 = sbr.rel (%p319) target = $region28
        $region27: #{tpu_custom_call.1} parent=15 // pred_region
          %s322 = smul.u32 4, %s22
          %p323 = scmp.lt.s32.totalorder %s322, 7
          %s324 = scalar_select %p323, %s322, 7
          %s325 = smul.addr %s324, 8
          %s326 = scalar_lea.vmem %s2, %s325
          %s327 = smul.u32 4, %s22
        $region28: #{tpu_custom_call.1} parent=15 // pred_fallthru
          _
        // Predicated region
        $region29: #{tpu_custom_call.1} parent=15 // pred_check
          %p328 = pneg %p120
        $region30: #{tpu_custom_call.1} parent=15 // pred_check_branch
          %330 = sbr.rel (%p328) target = $region32
        $region31: #{tpu_custom_call.1} parent=15 // pred_region
          %s331 = smul.u32 4, %s22
          %p332 = scmp.lt.s32.totalorder %s331, 7
          %s333 = scalar_select %p332, %s331, 7
          %s334 = smul.addr %s333, 8
          %s335 = scalar_lea.vmem %s3, %s334
          %s336 = smul.u32 4, %s22
        $region32: #{tpu_custom_call.1} parent=15 // pred_fallthru
          _
        // Predicated region
        $region33: #{tpu_custom_call.1} parent=15 // pred_check
          %p337 = pneg %p146
        $region34: #{tpu_custom_call.1} parent=15 // pred_check_branch
          %339 = sbr.rel (%p337) target = $region36
        $region35: #{tpu_custom_call.1} parent=15 // pred_region
          %s340 = smul.u32 4, %s22
          %p341 = scmp.lt.s32.totalorder %s340, 7
          %s342 = scalar_select %p341, %s340, 7
          %s343 = smul.addr %s342, 2
          %s344 = smul.addr %s343, 8
          %s345 = scalar_lea.vmem %s4, %s344
          %s346 = smul.u32 4, %s22
        $region36: #{tpu_custom_call.1} parent=15 // pred_fallthru
          _
        // Predicated region
        $region37: #{tpu_custom_call.1} parent=15 // pred_check
          %p347 = pneg %p172
        $region38: #{tpu_custom_call.1} parent=15 // pred_check_branch
          %349 = sbr.rel (%p347) target = $region40
        $region39: #{tpu_custom_call.1} parent=15 // pred_region
          %s350 = smul.u32 4, %s22
          %p351 = scmp.lt.s32.totalorder %s350, 7
          %s352 = scalar_select %p351, %s350, 7
          %s353 = smul.addr %s352, 8
          %s354 = scalar_lea.vmem %s5, %s353
          %s355 = smul.u32 4, %s22
        $region40: #{tpu_custom_call.1} parent=15 // pred_fallthru
          _
      $region16: #{tpu_custom_call.1} parent=5 // pred_fallthru
        _
      %p356 = scmp.le.s32.totalorder 1, %s22
      %p357 = scmp.lt.s32.totalorder %s22, 3
      %p358 = pnand %p356, %p357
      %p359 = pneg %p358
      // Predicated region
      $region41: #{tpu_custom_call.1} parent=5 // pred_check
        _
      $region42: #{tpu_custom_call.1} parent=5 // pred_check_branch
        %361 = sbr.rel (%p358) target = $region44
      $region43: #{tpu_custom_call.1} parent=5 // pred_region
        %s362 = ssub.s32 %s22, 1
        %s363 = smul.u32 4, %s27
        %p364 = scmp.lt.s32.totalorder %s363, 7
        %s365 = scalar_select %p364, %s363, 7
        %s366 = smul.addr %s365, 8
        %s367 = scalar_lea.vmem %s0, %s366
        %p368 = pneg %p48
        %p369 = pneg %p45
        %s370 = smul.u32 4, %s27
        %p371 = scmp.lt.s32.totalorder %s370, 7
        %s372 = scalar_select %p371, %s370, 7
        %s373 = smul.addr %s372, 8
        %s374 = scalar_lea.vmem %s1, %s373
        %p375 = pneg %p74
        %p376 = pneg %p71
        %s377 = smul.u32 4, %s27
        %p378 = scmp.lt.s32.totalorder %s377, 7
        %s379 = scalar_select %p378, %s377, 7
        %s380 = smul.addr %s379, 8
        %s381 = scalar_lea.vmem %s2, %s380
        %p382 = pneg %p100
        %p383 = pneg %p97
        %s384 = smul.u32 4, %s27
        %p385 = scmp.lt.s32.totalorder %s384, 7
        %s386 = scalar_select %p385, %s384, 7
        %s387 = smul.addr %s386, 8
        %s388 = scalar_lea.vmem %s3, %s387
        %p389 = pneg %p126
        %p390 = pneg %p123
        %s391 = smul.u32 4, %s27
        %p392 = scmp.lt.s32.totalorder %s391, 7
        %s393 = scalar_select %p392, %s391, 7
        %s394 = smul.addr %s393, 2
        %s395 = smul.addr %s394, 8
        %s396 = scalar_lea.vmem %s4, %s395
        %p397 = pneg %p152
        %p398 = pneg %p149
        %s399 = smul.u32 4, %s27
        %p400 = scmp.lt.s32.totalorder %s399, 7
        %s401 = scalar_select %p400, %s399, 7
        %s402 = smul.addr %s401, 8
        %s403 = scalar_lea.vmem %s5, %s402
        %p404 = pneg %p178
        %p405 = pneg %p175
        %p406 = pneg %p204
        %p407 = pneg %p201
        %s408 = smul.u32 4, %s27
        %p409 = scmp.lt.s32.totalorder %s408, 7
        %s410 = scalar_select %p409, %s408, 7
        %s411 = smul.addr %s410, 8
        %s412 = scalar_lea.vmem %s6, %s411
        %p413 = pneg %p230
        %p414 = pneg %p227
        %s415 = smul.u32 4, %s27
        %p416 = scmp.lt.s32.totalorder %s415, 7
        %s417 = scalar_select %p416, %s415, 7
        %s418 = smul.addr %s417, 8
        %s419 = scalar_lea.vmem %s7, %s418
        %p420 = pneg %p256
        %p421 = pneg %p253
        %s422 = sand.u32 %s243, 1
        %s423 = scalar_lea.sflag [#allocation3], %s422
        %s424 = sand.u32 %s243, 1
        %s425 = smul.addr %s424, 16
        %s426 = scalar_lea.vmem [#allocation2], %s425
        %p427 = pneg %p282
        %p428 = pneg %p279
        %s429 = sand.u32 %s269, 1
        %s430 = scalar_lea.sflag [#allocation5], %s429
        %s431 = sand.u32 %s269, 1
        %s432 = smul.addr %s431, 8
        %s433 = scalar_lea.vmem [#allocation4], %s432
        %s434 = smul.u32 4, %s27
        %p435 = scmp.lt.s32.totalorder %s434, 7
        %s436 = scalar_select %p435, %s434, 7
        %s437 = smul.addr %s436, 8
        %s438 = scalar_lea.vmem %s0, %s437
        %s439 = smul.u32 4, %s27
        %s440 = smul.u32 4, %s27
        %p441 = scmp.lt.s32.totalorder %s440, 7
        %s442 = scalar_select %p441, %s440, 7
        %s443 = smul.addr %s442, 8
        %s444 = scalar_lea.vmem %s1, %s443
        %s445 = smul.u32 4, %s27
        %s446 = smul.u32 4, %s27
        %p447 = scmp.lt.s32.totalorder %s446, 7
        %s448 = scalar_select %p447, %s446, 7
        %s449 = smul.addr %s448, 8
        %s450 = scalar_lea.vmem %s2, %s449
        %s451 = smul.u32 4, %s27
        %s452 = smul.u32 4, %s27
        %p453 = scmp.lt.s32.totalorder %s452, 7
        %s454 = scalar_select %p453, %s452, 7
        %s455 = smul.addr %s454, 8
        %s456 = scalar_lea.vmem %s3, %s455
        %s457 = smul.u32 4, %s27
        %s458 = smul.u32 4, %s27
        %p459 = scmp.lt.s32.totalorder %s458, 7
        %s460 = scalar_select %p459, %s458, 7
        %s461 = smul.addr %s460, 2
        %s462 = smul.addr %s461, 8
        %s463 = scalar_lea.vmem %s4, %s462
        %s464 = smul.u32 4, %s27
        %s465 = smul.u32 4, %s27
        %p466 = scmp.lt.s32.totalorder %s465, 7
        %s467 = scalar_select %p466, %s465, 7
        %s468 = smul.addr %s467, 8
        %s469 = scalar_lea.vmem %s5, %s468
        %s470 = smul.u32 4, %s27
        %s471 = smul.u32 4, %s27
        %p472 = scmp.lt.s32.totalorder %s471, 7
        %s473 = scalar_select %p472, %s471, 7
        %s474 = smul.addr %s473, 8
        %s475 = scalar_lea.vmem %s6, %s474
        %s476 = smul.u32 4, %s27
        %s477 = smul.u32 4, %s27
        %p478 = scmp.lt.s32.totalorder %s477, 7
        %s479 = scalar_select %p478, %s477, 7
        %s480 = smul.addr %s479, 8
        %s481 = scalar_lea.vmem %s7, %s480
        %s482 = smul.u32 4, %s27
        %v485 = vld [vmem:[%s438] sm:$0xff]
        %v486 = vld [vmem:[%s438 + $0x8] sm:$0xff]
        %v487 = vld [vmem:[%s438 + $0x10] sm:$0xff]
        %v488 = vld [vmem:[%s438 + $0x18] sm:$0xff]
        %v489 = vcvt.s32.f32 %v485
        %v490 = vcvt.s32.f32 %v486
        %v491 = vcvt.s32.f32 %v487
        %v492 = vcvt.s32.f32 %v488
        %v493 = vld [vmem:[%s444] sm:$0xff]
        %v494 = vld [vmem:[%s444 + $0x8] sm:$0xff]
        %v495 = vld [vmem:[%s444 + $0x10] sm:$0xff]
        %v496 = vld [vmem:[%s444 + $0x18] sm:$0xff]
        %v497 = vcvt.s32.f32 %v493
        %v498 = vcvt.s32.f32 %v494
        %v499 = vcvt.s32.f32 %v495
        %v500 = vcvt.s32.f32 %v496
        %v501 = vld [vmem:[%s450] sm:$0xff]
        %v502 = vld [vmem:[%s450 + $0x8] sm:$0xff]
        %v503 = vld [vmem:[%s450 + $0x10] sm:$0xff]
        %v504 = vld [vmem:[%s450 + $0x18] sm:$0xff]
        %vm505 = vcmp.ne.s32.totalorder %v501, 0
        %vm506 = vcmp.ne.s32.totalorder %v502, 0
        %vm507 = vcmp.ne.s32.totalorder %v503, 0
        %vm508 = vcmp.ne.s32.totalorder %v504, 0
        %v509 = vld [vmem:[%s456] sm:$0xff]
        %v510 = vld [vmem:[%s456 + $0x8] sm:$0xff]
        %v511 = vld [vmem:[%s456 + $0x10] sm:$0xff]
        %v512 = vld [vmem:[%s456 + $0x18] sm:$0xff]
        %vm513 = vcmp.ne.s32.totalorder %v509, 0
        %vm514 = vcmp.ne.s32.totalorder %v510, 0
        %vm515 = vcmp.ne.s32.totalorder %v511, 0
        %vm516 = vcmp.ne.s32.totalorder %v512, 0
        %v517 = vsel %vm505, -100.0, %v489
        %v518 = vsel %vm506, -100.0, %v490
        %v519 = vsel %vm507, -100.0, %v491
        %v520 = vsel %vm508, -100.0, %v492
        %v521 = vsel %vm513, -100.0, %v497
        %v522 = vsel %vm514, -100.0, %v498
        %v523 = vsel %vm515, -100.0, %v499
        %v524 = vsel %vm516, -100.0, %v500
        %vm525 = vcmask 89088
        %526 = vst.msk [vmem:[%s475] sm:$0xff] %vm525, %v517
        %527 = vst.msk [vmem:[%s475 + $0x8] sm:$0xff] %vm525, %v518
        %528 = vst.msk [vmem:[%s475 + $0x10] sm:$0xff] %vm525, %v519
        %529 = vst.msk [vmem:[%s475 + $0x18] sm:$0xff] %vm525, %v520
        %530 = vst.msk [vmem:[%s481] sm:$0xff] %vm525, %v521
        %531 = vst.msk [vmem:[%s481 + $0x8] sm:$0xff] %vm525, %v522
        %532 = vst.msk [vmem:[%s481 + $0x10] sm:$0xff] %vm525, %v523
        %533 = vst.msk [vmem:[%s481 + $0x18] sm:$0xff] %vm525, %v524
        %v534 = vld [vmem:[%s463] sm:$0xff]
        %v535 = vld [vmem:[%s463 + $0x8] sm:$0xff]
        %v536 = vld [vmem:[%s463 + $0x10] sm:$0xff]
        %v537 = vld [vmem:[%s463 + $0x18] sm:$0xff]
        %v538 = vld [vmem:[%s463 + $0x20] sm:$0xff]
        %v539 = vld [vmem:[%s463 + $0x28] sm:$0xff]
        %v540 = vld [vmem:[%s463 + $0x30] sm:$0xff]
        %v541 = vld [vmem:[%s463 + $0x38] sm:$0xff]
        %vm542 = vcmp.ne.s32.totalorder %v534, 0
        %vm543 = vcmp.ne.s32.totalorder %v535, 0
        %vm544 = vcmp.ne.s32.totalorder %v536, 0
        %vm545 = vcmp.ne.s32.totalorder %v537, 0
        %vm546 = vcmp.ne.s32.totalorder %v538, 0
        %vm547 = vcmp.ne.s32.totalorder %v539, 0
        %vm548 = vcmp.ne.s32.totalorder %v540, 0
        %vm549 = vcmp.ne.s32.totalorder %v541, 0
        %vm550 = vmpackc.low %vm544, %vm542
        %vm551 = vmpackc.low %vm548, %vm546
        %v552 = vsel %vm550, 16711935, 0
        %v553 = vsel %vm551, 16711935, 0
        %v554 = vpack.c.b8 %v553, %v552
        %vm555 = vnez %v554
        %vm556 = vmpackc.low %vm545, %vm543
        %vm557 = vmpackc.low %vm549, %vm547
        %v558 = vsel %vm556, 16711935, 0
        %v559 = vsel %vm557, 16711935, 0
        %v560 = vpack.c.b8 %v559, %v558
        %vm561 = vnez %v560
        %v562 = vsel %vm555, 16843009, 0
        %v563 = vsel %vm561, 16843009, 0
        %564 = vst [vmem:[%s426] sm:$0xff] %v562
        %565 = vst [vmem:[%s426 + $0x8] sm:$0xff] %v563
        %v566 = vld [vmem:[%s469] sm:$0xff]
        %v567 = vld [vmem:[%s469 + $0x8] sm:$0xff]
        %v568 = vld [vmem:[%s469 + $0x10] sm:$0xff]
        %v569 = vld [vmem:[%s469 + $0x18] sm:$0xff]
        %vm570 = vcmp.ne.s32.totalorder %v566, 0
        %vm571 = vcmp.ne.s32.totalorder %v567, 0
        %vm572 = vcmp.ne.s32.totalorder %v568, 0
        %vm573 = vcmp.ne.s32.totalorder %v569, 0
        %vm574 = vmpackc.low %vm571, %vm570
        %vm575 = vmpackc.low %vm573, %vm572
        %v576 = vsel %vm574, 16711935, 0
        %v577 = vsel %vm575, 16711935, 0
        %v578 = vpack.c.b8 %v577, %v576
        %vm579 = vnez %v578
        %v580 = vsel %vm579, 16843009, 0
        %581 = vst [vmem:[%s433] sm:$0xff] %v580
        %s582 = smul.u32 4, %s27
        %p583 = scmp.lt.s32.totalorder %s582, 7
        %s584 = scalar_select %p583, %s582, 7
        %s585 = smul.addr %s584, 8
        %s586 = scalar_lea.vmem %s6, %s585
        %s587 = smul.u32 4, %s27
        %p588 = scmp.lt.s32.totalorder %s587, 7
        %s589 = scalar_select %p588, %s587, 7
        %s590 = smul.addr %s589, 8
        %s591 = scalar_lea.vmem %s7, %s590
        %s592 = sand.u32 %s243, 1
        %s593 = scalar_lea.sflag [#allocation3], %s592
        %s594 = sand.u32 %s243, 1
        %s595 = smul.addr %s594, 16
        %s596 = scalar_lea.vmem [#allocation2], %s595
        %s597 = sand.u32 %s269, 1
        %s598 = scalar_lea.sflag [#allocation5], %s597
        %s599 = sand.u32 %s269, 1
        %s600 = smul.addr %s599, 8
        %s601 = scalar_lea.vmem [#allocation4], %s600
        // Predicated region
        $region45: #{tpu_custom_call.1} parent=43 // pred_check
          %p602 = pneg %p201
        $region46: #{tpu_custom_call.1} parent=43 // pred_check_branch
          %604 = sbr.rel (%p602) target = $region48
        $region47: #{tpu_custom_call.1} parent=43 // pred_region
          %s605 = smul.u32 4, %s27
        $region48: #{tpu_custom_call.1} parent=43 // pred_fallthru
          _
        // Predicated region
        $region49: #{tpu_custom_call.1} parent=43 // pred_check
          %p606 = pneg %p227
        $region50: #{tpu_custom_call.1} parent=43 // pred_check_branch
          %608 = sbr.rel (%p606) target = $region52
        $region51: #{tpu_custom_call.1} parent=43 // pred_region
          %s609 = smul.u32 4, %s27
        $region52: #{tpu_custom_call.1} parent=43 // pred_fallthru
          _
        // Predicated region
        $region53: #{tpu_custom_call.1} parent=43 // pred_check
          %p610 = pneg %p253
        $region54: #{tpu_custom_call.1} parent=43 // pred_check_branch
          %612 = sbr.rel (%p610) target = $region56
        $region55: #{tpu_custom_call.1} parent=43 // pred_region
          %614 = vsyncadd %s593, 0
          %s615 = smul.addr %s27, 2
          %s616 = smul.addr %s615, 8
          %s617 = scalar_lea.hbm %s8, %s616
          %s619 = sshll.u32 %s596, 4
          %s620 = int_to_ptr.vmem [resolvable:$true] %s619
          %s621 = sshll.u32 %s617, 4
          %s622 = int_to_ptr.hbm [resolvable:$true] %s621
          %624 = dma.vmem_to_hbm [thread:$0]  %s620, 256, %s622, %s593
        $region56: #{tpu_custom_call.1} parent=43 // pred_fallthru
          _
        // Predicated region
        $region57: #{tpu_custom_call.1} parent=43 // pred_check
          %p625 = pneg %p279
        $region58: #{tpu_custom_call.1} parent=43 // pred_check_branch
          %627 = sbr.rel (%p625) target = $region60
        $region59: #{tpu_custom_call.1} parent=43 // pred_region
          %629 = vsyncadd %s598, 0
          %s630 = smul.addr %s27, 8
          %s631 = scalar_lea.hbm %s9, %s630
          %s633 = sshll.u32 %s601, 4
          %s634 = int_to_ptr.vmem [resolvable:$true] %s633
          %s635 = sshll.u32 %s631, 4
          %s636 = int_to_ptr.hbm [resolvable:$true] %s635
          %638 = dma.vmem_to_hbm [thread:$0]  %s634, 128, %s636, %s598
        $region60: #{tpu_custom_call.1} parent=43 // pred_fallthru
          _
      $region44: #{tpu_custom_call.1} parent=5 // pred_fallthru
        _
      %p639 = scmp.le.s32.totalorder 2, %s22
      // Predicated region
      $region61: #{tpu_custom_call.1} parent=5 // pred_check
        %p640 = pneg %p639
      $region62: #{tpu_custom_call.1} parent=5 // pred_check_branch
        %642 = sbr.rel (%p640) target = $region64
      $region63: #{tpu_custom_call.1} parent=5 // pred_region
        %s643 = ssub.s32 %s22, 2
        // Predicated region
        $region65: #{tpu_custom_call.1} parent=63 // pred_check
          %p644 = pneg %p207
        $region66: #{tpu_custom_call.1} parent=63 // pred_check_branch
          %646 = sbr.rel (%p644) target = $region68
        $region67: #{tpu_custom_call.1} parent=63 // pred_region
          %s647 = smul.u32 4, %s28
          %p648 = scmp.lt.s32.totalorder %s647, 7
          %s649 = scalar_select %p648, %s647, 7
          %s650 = smul.addr %s649, 8
          %s651 = scalar_lea.vmem %s6, %s650
        $region68: #{tpu_custom_call.1} parent=63 // pred_fallthru
          _
        // Predicated region
        $region69: #{tpu_custom_call.1} parent=63 // pred_check
          %p652 = pneg %p233
        $region70: #{tpu_custom_call.1} parent=63 // pred_check_branch
          %654 = sbr.rel (%p652) target = $region72
        $region71: #{tpu_custom_call.1} parent=63 // pred_region
          %s655 = smul.u32 4, %s28
          %p656 = scmp.lt.s32.totalorder %s655, 7
          %s657 = scalar_select %p656, %s655, 7
          %s658 = smul.addr %s657, 8
          %s659 = scalar_lea.vmem %s7, %s658
        $region72: #{tpu_custom_call.1} parent=63 // pred_fallthru
          _
        // Predicated region
        $region73: #{tpu_custom_call.1} parent=63 // pred_check
          %p660 = pneg %p259
        $region74: #{tpu_custom_call.1} parent=63 // pred_check_branch
          %662 = sbr.rel (%p660) target = $region76
        $region75: #{tpu_custom_call.1} parent=63 // pred_region
          %s663 = sand.u32 %s244, 1
          %s664 = scalar_lea.sflag [#allocation3], %s663
          %s665 = sand.u32 %s244, 1
          %s666 = smul.addr %s665, 16
          %s667 = scalar_lea.vmem [#allocation2], %s666
          %669 = dma.done %s664, 256
        $region76: #{tpu_custom_call.1} parent=63 // pred_fallthru
          _
        // Predicated region
        $region77: #{tpu_custom_call.1} parent=63 // pred_check
          %p670 = pneg %p285
        $region78: #{tpu_custom_call.1} parent=63 // pred_check_branch
          %672 = sbr.rel (%p670) target = $region80
        $region79: #{tpu_custom_call.1} parent=63 // pred_region
          %s673 = sand.u32 %s270, 1
          %s674 = scalar_lea.sflag [#allocation5], %s673
          %s675 = sand.u32 %s270, 1
          %s676 = smul.addr %s675, 8
          %s677 = scalar_lea.vmem [#allocation4], %s676
          %679 = dma.done %s674, 128
        $region80: #{tpu_custom_call.1} parent=63 // pred_fallthru
          _
      $region64: #{tpu_custom_call.1} parent=5 // pred_fallthru
        _
    $region6: #{tpu_custom_call.1} parent=1 // loop_footer
      %s26 = sadd.s32 1, %s22
    $region7: #{tpu_custom_call.1} parent=1 // loop_footer_branch
      %21 = sbr.rel target = $region3
    $region8: #{tpu_custom_call.1} parent=1 // loop_exit
      _
    %680 = vsyncpa [#allocation3], 1
    %s681 = scalar_lea.sflag [#allocation3], 1
    %682 = vsyncpa %s681, 1
    %683 = vsyncpa [#allocation5], 1
    %s684 = scalar_lea.sflag [#allocation5], 1
    %685 = vsyncpa %s684, 1

</llo_original>
